<compile_context>
chip_gen: v5e
topology: v5e:2x2
jax: 0.10.0
libtpu: 0.0.40
codegen_flags: <defaults>
</compile_context>

<pallas_src>
import functools

import jax
import jax.numpy as jnp
from jax.experimental import pallas as pl
from jax.experimental.pallas import tpu as pltpu

_EPS = 1e-12            # F.normalize default eps
_MIN_GRID_STEPS = 8     # keep >= ~2x num TensorCores grid steps for pipelining / v7x


def _round_up(a, b):
    return ((a + b - 1) // b) * b


def _sublane_granule(dtype):
    # 8 for f32, 16 for bf16, 32 for int8/fp8 (sublane packing granule).
    return max(8, 32 // max(1, jnp.dtype(dtype).itemsize))


def _vmem_plan():
    """Return (target_tile_bytes, vmem_limit_cap) for the current TPU generation."""
    try:
        info = pltpu.get_tpu_info()
        phys = int(getattr(info, "vmem_capacity_bytes", 128 * 1024 * 1024))
    except Exception:  # not on TPU / interpret mode: assume the roomy case
        phys = 128 * 1024 * 1024
    if phys <= 64 * 1024 * 1024:       # v7x-class core: 64 MiB physical VMEM
        return 2 << 20, 48 << 20
    return 4 << 20, 96 << 20           # v5e / v6e: 128 MiB physical VMEM


def _inv_norm(xf, axis, p):
    """f32 inverse L_p norm along `axis` (keepdims), clamped like F.normalize."""
    if p == 2:
        s = jnp.sum(xf * xf, axis=axis, keepdims=True)
        return jax.lax.rsqrt(jnp.maximum(s, _EPS * _EPS))
    if p == 1:
        s = jnp.sum(jnp.abs(xf), axis=axis, keepdims=True)
        return pl.reciprocal(jnp.maximum(s, _EPS), approx=True)
    a = jnp.abs(xf)
    if isinstance(p, int) and 2 < p <= 4:
        ap = a
        for _ in range(p - 1):
            ap = ap * a
        s = jnp.sum(ap, axis=axis, keepdims=True)
        norm = jnp.sqrt(jnp.sqrt(s)) if p == 4 else s ** (1.0 / p)
    else:
        # TODO(synk): float pow lowers to exp(p*log|x|) on the single EUP slot;
        # non-integer p > 0 is correct here but EUP-bound.
        s = jnp.sum(a ** p, axis=axis, keepdims=True)
        norm = s ** (1.0 / p)
    return pl.reciprocal(jnp.maximum(norm, _EPS), approx=True)


# ------------------------- (N, C, L): normalize over C -------------------------


def _normalize_ncl_kernel(x_ref, o_ref, *, p):
    x = x_ref[...]                                        # (1, C, tile_l)
    inv = _inv_norm(x.astype(jnp.float32), axis=-2, p=p)
    o_ref[...] = (x * inv.astype(x.dtype)).astype(o_ref.dtype)


def _normalize_ncl(x3, p=2):
    """x3: (N, C, L); L_p-normalize over axis 1, NCHW layout kept native."""
    N, C, L = x3.shape
    itemsize = jnp.dtype(x3.dtype).itemsize
    granule = _sublane_granule(x3.dtype)
    target_tile_bytes, vmem_cap = _vmem_plan()

    c_pad = _round_up(C, granule)                         # sublane padding of C

    if L <= 128:
        tile_l = L                                        # full dim: always legal
    else:
        # Budget cap: keep the (c_pad, tile_l) slab near the per-generation target.
        cap_budget = max(128, (target_tile_bytes // max(1, c_pad * itemsize)) // 128 * 128)
        # Pipelining / megacore cap: aim for >= _MIN_GRID_STEPS total grid steps.
        want_spatial = max(1, -(-_MIN_GRID_STEPS // N))
        cap_steps = max(128, (L // want_spatial) // 128 * 128)
        tile_l = max(128, min(cap_budget, cap_steps, _round_up(L, 128)))

    grid = (N, pl.cdiv(L, tile_l))

    tile_bytes = c_pad * tile_l * itemsize
    # 2 input + 2 output buffers in the native dtype + f32 reduction intermediates.
    working = 4 * tile_bytes + 2 * c_pad * tile_l * 4 + (2 << 20)
    vmem_limit = int(min(max(working, 16 << 20), vmem_cap))
    # TODO(synk): if even the minimal (c_pad, 128) tile overflows vmem_cap
    # (enormous C), a two-pass channel-tiled reduction ('arbitrary' axis) is
    # required; not implemented here.

    cost = pl.CostEstimate(
        flops=3 * x3.size,
        transcendentals=x3.size // max(1, C),
        bytes_accessed=2 * x3.size * itemsize,
    )

    return pl.pallas_call(
        functools.partial(_normalize_ncl_kernel, p=p),
        out_shape=jax.ShapeDtypeStruct((N, C, L), x3.dtype),
        grid_spec=pltpu.PrefetchScalarGridSpec(
            num_scalar_prefetch=0,
            grid=grid,
            in_specs=[pl.BlockSpec((1, C, tile_l), lambda n, s: (n, 0, s))],
            out_specs=pl.BlockSpec((1, C, tile_l), lambda n, s: (n, 0, s)),
        ),
        compiler_params=pltpu.CompilerParams(
            dimension_semantics=("parallel", "parallel"),
            vmem_limit_bytes=vmem_limit,
        ),
        cost_estimate=cost,
    )(x3)


# ------------------------------ (M, C) rows path ------------------------------


def _normalize_rows_kernel(x_ref, o_ref, *, p):
    x = x_ref[...]                                        # (tm, C)
    inv = _inv_norm(x.astype(jnp.float32), axis=-1, p=p)
    o_ref[...] = (x * inv.astype(x.dtype)).astype(o_ref.dtype)


def _normalize_rows_grouped_kernel(x_ref, o_ref, *, p, C):
    # x_ref: (tm, L) with L = g*C -- g logical rows packed per 128-lane block.
    x = x_ref[...]
    L = x.shape[-1]
    xf = x.astype(jnp.float32)
    # Block-diagonal segment matrix: seg[k, j] = 1 iff lanes k, j are in one row.
    ri = jax.lax.broadcasted_iota(jnp.int32, (L, L), 0) // C
    ci = jax.lax.broadcasted_iota(jnp.int32, (L, L), 1) // C
    seg = (ri == ci).astype(jnp.float32)

    def segsum(v):  # per-segment sums, already broadcast back to every lane
        return jnp.dot(v, seg, preferred_element_type=jnp.float32,
                       precision=jax.lax.Precision.HIGHEST)

    if p == 2:
        inv = jax.lax.rsqrt(jnp.maximum(segsum(xf * xf), _EPS * _EPS))
    elif p == 1:
        inv = pl.reciprocal(jnp.maximum(segsum(jnp.abs(xf)), _EPS), approx=True)
    else:
        a = jnp.abs(xf)
        if isinstance(p, int) and 2 < p <= 4:
            ap = a
            for _ in range(p - 1):
                ap = ap * a
        else:
            ap = a ** p  # TODO(synk): EUP-bound for non-integer p
        s = segsum(ap)
        norm = jnp.sqrt(jnp.sqrt(s)) if p == 4 else s ** (1.0 / p)
        inv = pl.reciprocal(jnp.maximum(norm, _EPS), approx=True)
    o_ref[...] = (x * inv.astype(x.dtype)).astype(o_ref.dtype)


def _normalize_rows(x2d, p=2):
    """x2d: (M, C); L_p-normalize each row (dim=1 of a 2-D input)."""
    M, C = x2d.shape
    itemsize = jnp.dtype(x2d.dtype).itemsize
    granule = _sublane_granule(x2d.dtype)
    target_tile_bytes, vmem_cap = _vmem_plan()

    # Lane-dense small-C path: pack g = 128 // C rows per 128-lane block.
    use_group = (0 < C < 128) and (128 % C == 0) and (M % (128 // C) == 0)
    if use_group:
        g = 128 // C
        Mg, L = M // g, 128
        xv = x2d.reshape(Mg, L)                           # free view (row-major)
        kernel = functools.partial(_normalize_rows_grouped_kernel, p=p, C=C)
    else:
        Mg, L = M, C
        xv = x2d
        kernel = functools.partial(_normalize_rows_kernel, p=p)

    row_bytes = _round_up(L, 128) * itemsize              # lane padding of a row
    tm_budget = max(granule, (target_tile_bytes // max(1, row_bytes)) // granule * granule)
    tm_steps = max(granule, (max(1, Mg // _MIN_GRID_STEPS) // granule) * granule)
    tm = min(tm_budget, tm_steps)
    if Mg <= tm:
        tm = Mg                                           # full dim: always legal

    grid = (pl.cdiv(Mg, tm),)

    tile_bytes = tm * row_bytes
    working = 4 * tile_bytes + 2 * tm * _round_up(L, 128) * 4 + (2 << 20)
    vmem_limit = int(min(max(working, 16 << 20), vmem_cap))

    cost = pl.CostEstimate(
        flops=3 * M * C,
        transcendentals=M,
        bytes_accessed=2 * M * C * itemsize,
    )

    out = pl.pallas_call(
        kernel,
        out_shape=jax.ShapeDtypeStruct((Mg, L), x2d.dtype),
        grid_spec=pltpu.PrefetchScalarGridSpec(
            num_scalar_prefetch=0,
            grid=grid,
            in_specs=[pl.BlockSpec((tm, L), lambda i: (i, 0))],
            out_specs=pl.BlockSpec((tm, L), lambda i: (i, 0)),
        ),
        compiler_params=pltpu.CompilerParams(
            dimension_semantics=("parallel",),
            vmem_limit_bytes=vmem_limit,
        ),
        cost_estimate=cost,
    )(xv)
    return out.reshape(M, C)


# ---------------------------------- public API ---------------------------------


def normalize(x, p=2):
    """Equivalent of torch.nn.functional.normalize(x, p=p, dim=1)."""
    if x.ndim == 2:
        return _normalize_rows(x, p=p)
    if x.ndim >= 3:
        N, C = x.shape[0], x.shape[1]
        rest = 1
        for d in x.shape[2:]:
            rest *= d
        if rest == 1:  # e.g. (N, C, 1, 1): route to the lane-dense rows path
            return _normalize_rows(x.reshape(N, C), p=p).reshape(x.shape)
        return _normalize_ncl(x.reshape(N, C, rest), p=p).reshape(x.shape)
    raise ValueError("normalize: expected input with ndim >= 2 (dim=1 semantics)")


class Normalize:
    """Pallas-TPU equivalent of the PyTorch `Normalize` module."""

    def __init__(self, p=2):
        self.p = p

    def __call__(self, x):
        return normalize(x, p=self.p)


if __name__ == "__main__":
    key = jax.random.PRNGKey(0)
    k1, k2 = jax.random.split(key, 2)

    mod = Normalize(p=2)

    # 4-D NCHW input (the module's typical use).
    x = jax.random.normal(k1, (2, 4, 16, 16), dtype=jnp.float32)
    y = jax.block_until_ready(mod(x))
    n = jnp.sqrt(jnp.sum(x * x, axis=1, keepdims=True))
    y_ref = x / jnp.maximum(n, _EPS)
    assert y.shape == x.shape and y.dtype == x.dtype
    assert float(jnp.max(jnp.abs(y - y_ref))) < 1e-5

    # 2-D small-C input (grouped lane-dense path).
    x2 = jax.random.normal(k2, (256, 32), dtype=jnp.float32)
    y2 = jax.block_until_ready(mod(x2))
    n2 = jnp.sqrt(jnp.sum(x2 * x2, axis=1, keepdims=True))
    assert float(jnp.max(jnp.abs(y2 - x2 / jnp.maximum(n2, _EPS)))) < 1e-4

    # p = 1 path (approximate EUP reciprocal -> slightly looser tolerance).
    y1 = jax.block_until_ready(normalize(x, p=1))
    n1 = jnp.sum(jnp.abs(x), axis=1, keepdims=True)
    assert float(jnp.max(jnp.abs(y1 - x / jnp.maximum(n1, _EPS)))) < 1e-2

    print("KERNEL_OK")
</pallas_src>

<mosaic_0001>
module attributes {stable_mosaic.version = 11 : i64} {
  func.func @_normalize_ncl_kernel(%arg0: i32, %arg1: i32, %arg2: memref<1x4x128xf32, #tpu.memory_space<vmem>>, %arg3: memref<1x4x128xf32, #tpu.memory_space<vmem>>) attributes {dimension_semantics = [#tpu.dimension_semantics<parallel>, #tpu.dimension_semantics<parallel>], iteration_bounds = array<i64: 2, 2>, scalar_prefetch = 0 : i64, scratch_operands = 0 : i64, tpu.core_type = #tpu.core_type<tc>, window_params = [{transform_indices = @transform_0, window_bounds = array<i64: 1, 4, 128>}, {transform_indices = @transform_1, window_bounds = array<i64: 1, 4, 128>}]} {
    %c0 = arith.constant 0 : index
    %c0_0 = arith.constant 0 : index
    %c0_1 = arith.constant 0 : index
    %0 = vector.load %arg2[%c0, %c0_0, %c0_1] : memref<1x4x128xf32, #tpu.memory_space<vmem>>, vector<1x4x128xf32>
    %1 = arith.mulf %0, %0 : vector<1x4x128xf32>
    %cst = arith.constant dense<0.000000e+00> : vector<1x128xf32>
    %2 = vector.multi_reduction <add>, %1, %cst [1] : vector<1x4x128xf32> to vector<1x128xf32>
    %3 = vector.shape_cast %2 : vector<1x128xf32> to vector<1x1x128xf32>
    %cst_2 = arith.constant 1.000000e-24 : f32
    %4 = vector.broadcast %cst_2 : f32 to vector<1x1x128xf32>
    %5 = arith.maximumf %3, %4 : vector<1x1x128xf32>
    %6 = math.rsqrt %5 : vector<1x1x128xf32>
    %7 = vector.broadcast %6 : vector<1x1x128xf32> to vector<1x4x128xf32>
    %8 = arith.mulf %0, %7 : vector<1x4x128xf32>
    %c0_3 = arith.constant 0 : index
    %c0_4 = arith.constant 0 : index
    %c0_5 = arith.constant 0 : index
    %9 = vector.load %arg3[%c0_3, %c0_4, %c0_5] : memref<1x4x128xf32, #tpu.memory_space<vmem>>, vector<1x4x128xf32>
    tpu.vector_store %arg3[%c0_3, %c0_4, %c0_5], %8 {strides = array<i32>} : memref<1x4x128xf32, #tpu.memory_space<vmem>>, vector<1x4x128xf32>,
    return
  }
  func.func @transform_0(%arg0: i32, %arg1: i32) -> (i32, i32, i32) {
    %c0_i32 = arith.constant 0 : i32
    %c0_i32_0 = arith.constant 0 : i32
    return %arg0, %c0_i32, %arg1 : i32, i32, i32
  }
  func.func @transform_1(%arg0: i32, %arg1: i32) -> (i32, i32, i32) {
    %c0_i32 = arith.constant 0 : i32
    %c0_i32_0 = arith.constant 0 : i32
    return %arg0, %c0_i32, %arg1 : i32, i32, i32
  }
}

</mosaic_0001>

<llo_original>
// kernel: tpu_custom_call.1
$region0: #{tpu_custom_call.1}
  #allocation0 [shape = 'u32[]', space=smem, size = 0x4, offset = 0x4, fixed_abs, tag = 'smem constant byte address 0x4 - core index']
  #allocation1 [shape = 'u32[72,128]{1,0:T(1,128)}', space=vmem, size = 0x9000, scoped, tag = 'internal scratch']
  %s0 = inlined_call_operand.hbm [shape: f32[2,4,256], index: 0, kind: input, shape index: {}]
  %s1 = inlined_call_operand.hbm [shape: f32[2,4,256], index: 1, kind: output, shape index: {}]
  %s2 = sld [smem:[#allocation0]]
  $region41: #{tpu_custom_call.1} parent=0
    _
  %s4 = ssub.s32 1, %s2
  %s5 = scalar_select 0, %s4, %s2
  $region1: #{tpu_custom_call.1} parent=0
    #allocation2 [shape = 'u8[4096]{0}', space=vmem, size = 0x1000, scoped, tag = 'input window, operand 0']
    #allocation3 [shape = 's32[2]{0}', space=sflag, size = 0x8, scoped, tag = 'scoped memory for tpu_custom_call.1']
    #allocation4 [shape = 's32[2]{0}', space=sflag, size = 0x8, scoped, tag = 'scoped memory for tpu_custom_call.1']
    #allocation5 [shape = 'u8[4096]{0}', space=vmem, size = 0x1000, scoped, tag = 'output window, operand 0']
    %6 = vsyncpa [#allocation3], 0
    %s7 = scalar_lea.sflag [#allocation3], 1
    %8 = vsyncpa %s7, 0
    %9 = vsyncpa [#allocation4], 0
    %s10 = scalar_lea.sflag [#allocation4], 1
    %11 = vsyncpa %s10, 0
    loop: start=0, step=1, limit=6
    $region2: #{tpu_custom_call.1} parent=1 // loop_pre_header
      _
    $region3: #{tpu_custom_call.1} parent=1 // loop_header
      %s13 = sphi 0, %s17
      %p14 = scmp.ge.s32.totalorder %s13, 6
      %s20 = sphi 0, %s32
      %s21 = sphi 0, %s28
      %s22 = sphi 0, %s20
      %s23 = sphi 0, %s21
      %s24 = sphi 0, %s22
      %s25 = sphi 0, %s23
      %s37 = sphi 0, %s39
      %s40 = sphi 0, %s37
      %s41 = sphi 0, %s40
      %s57 = sphi 0, %s41
      %s65 = sphi 0, %s67
      %s68 = sphi 0, %s65
      %s69 = sphi 0, %s68
      %s85 = sphi 0, %s69
    $region4: #{tpu_custom_call.1} parent=1 // loop_header_branch
      %16 = sbr.rel (%p14) target = $region8
    $region5: #{tpu_custom_call.1} parent=1 // loop_body
      %s18 = ssub.s32 %s13, 1
      %s19 = ssub.s32 %s13, 2
      %s26 = sadd.s32 1, %s21
      %p27 = scmp.ge.s32.totalorder %s26, 2
      %s28 = scalar_select %p27, 0, %s26
      %s29 = sadd.s32 1, %s20
      %s30 = scalar_select %p27, %s29, %s20
      %p31 = scmp.ge.s32.totalorder %s30, 2
      %s32 = scalar_select %p31, 0, %s30
      %s33 = ssub.s32 %s20, %s32
      %s34 = ssub.s32 %s21, %s28
      %s35 = sor.u32 %s33, %s34
      %p36 = scmp.eq.s32.totalorder %s35, 0
      %s38 = sadd.s32 %s37, 1
      %s39 = scalar_select %p36, %s37, %s38
      %p42 = pneg %p36
      %p43 = scmp.eq.s32.totalorder %s13, 3
      %p44 = por %p42, %p43
      %p45 = scmp.ne.s32.totalorder %s37, %s40
      %p46 = scmp.eq.s32.totalorder %s13, 0
      %p47 = por %p45, %p46
      %p48 = scmp.ne.s32.totalorder %s37, %s40
      %p49 = scmp.eq.s32.totalorder %s18, 3
      %p50 = por %p48, %p49
      %p51 = scmp.ne.s32.totalorder %s40, %s41
      %p52 = scmp.eq.s32.totalorder %s18, 0
      %p53 = por %p51, %p52
      %p54 = scmp.ne.s32.totalorder %s40, %s41
      %p55 = scmp.eq.s32.totalorder %s19, 3
      %p56 = por %p54, %p55
      %p58 = scmp.ne.s32.totalorder %s41, %s57
      %p59 = scmp.eq.s32.totalorder %s19, 0
      %p60 = por %p58, %p59
      %s61 = ssub.s32 %s20, %s32
      %s62 = ssub.s32 %s21, %s28
      %s63 = sor.u32 %s61, %s62
      %p64 = scmp.eq.s32.totalorder %s63, 0
      %s66 = sadd.s32 %s65, 1
      %s67 = scalar_select %p64, %s65, %s66
      %p70 = pneg %p64
      %p71 = scmp.eq.s32.totalorder %s13, 3
      %p72 = por %p70, %p71
      %p73 = scmp.ne.s32.totalorder %s65, %s68
      %p74 = scmp.eq.s32.totalorder %s13, 0
      %p75 = por %p73, %p74
      %p76 = scmp.ne.s32.totalorder %s65, %s68
      %p77 = scmp.eq.s32.totalorder %s18, 3
      %p78 = por %p76, %p77
      %p79 = scmp.ne.s32.totalorder %s68, %s69
      %p80 = scmp.eq.s32.totalorder %s18, 0
      %p81 = por %p79, %p80
      %p82 = scmp.ne.s32.totalorder %s68, %s69
      %p83 = scmp.eq.s32.totalorder %s19, 3
      %p84 = por %p82, %p83
      %p86 = scmp.ne.s32.totalorder %s69, %s85
      %p87 = scmp.eq.s32.totalorder %s19, 0
      %p88 = por %p86, %p87
      %p89 = scmp.le.s32.totalorder 1, %s13
      %p90 = scmp.lt.s32.totalorder %s13, 5
      %p91 = pnand %p89, %p90
      %p92 = pneg %p91
      // Predicated region
      $region9: #{tpu_custom_call.1} parent=5 // pred_check
        _
      $region10: #{tpu_custom_call.1} parent=5 // pred_check_branch
        %94 = sbr.rel (%p91) target = $region12
      $region11: #{tpu_custom_call.1} parent=5 // pred_region
        %s95 = ssub.s32 %s13, 1
      $region12: #{tpu_custom_call.1} parent=5 // pred_fallthru
        _
      %p96 = scmp.lt.s32.totalorder %s13, 4
      // Predicated region
      $region13: #{tpu_custom_call.1} parent=5 // pred_check
        %p97 = pneg %p96
      $region14: #{tpu_custom_call.1} parent=5 // pred_check_branch
        %99 = sbr.rel (%p97) target = $region16
      $region15: #{tpu_custom_call.1} parent=5 // pred_region
        // Predicated region
        $region17: #{tpu_custom_call.1} parent=15 // pred_check
          %p100 = pneg %p47
        $region18: #{tpu_custom_call.1} parent=15 // pred_check_branch
          %102 = sbr.rel (%p100) target = $region20
        $region19: #{tpu_custom_call.1} parent=15 // pred_region
          %s103 = sand.u32 %s37, 1
          %s104 = scalar_lea.sflag [#allocation3], %s103
          %s105 = sand.u32 %s37, 1
          %s106 = smul.addr %s105, 4
          %s107 = scalar_lea.vmem [#allocation2], %s106
          %109 = vsyncadd %s104, 0
          %s110 = smul.addr %s20, 2
          %s111 = sadd.s32 %s21, %s110
          %s112 = smul.addr %s111, 4
          %s113 = scalar_lea.hbm %s0, %s112
          %s115 = sshll.u32 %s113, 4
          %s116 = int_to_ptr.hbm [resolvable:$true] %s115
          %s117 = sshll.u32 %s107, 4
          %s118 = int_to_ptr.vmem [resolvable:$true] %s117
          %120 = dma.hbm_to_vmem [thread:$0]  %s116, 64, %s118, %s104
        $region20: #{tpu_custom_call.1} parent=15 // pred_fallthru
          _
      $region16: #{tpu_custom_call.1} parent=5 // pred_fallthru
        _
      %p121 = scmp.le.s32.totalorder 1, %s13
      %p122 = scmp.lt.s32.totalorder %s13, 5
      %p123 = pnand %p121, %p122
      %p124 = pneg %p123
      // Predicated region
      $region21: #{tpu_custom_call.1} parent=5 // pred_check
        _
      $region22: #{tpu_custom_call.1} parent=5 // pred_check_branch
        %126 = sbr.rel (%p123) target = $region24
      $region23: #{tpu_custom_call.1} parent=5 // pred_region
        %s127 = ssub.s32 %s13, 1
        %s128 = sand.u32 %s40, 1
        %s129 = scalar_lea.sflag [#allocation3], %s128
        %s130 = sand.u32 %s40, 1
        %s131 = smul.addr %s130, 4
        %s132 = scalar_lea.vmem [#allocation2], %s131
        // Predicated region
        $region25: #{tpu_custom_call.1} parent=23 // pred_check
          %p133 = pneg %p53
        $region26: #{tpu_custom_call.1} parent=23 // pred_check_branch
          %135 = sbr.rel (%p133) target = $region28
        $region27: #{tpu_custom_call.1} parent=23 // pred_region
          %137 = dma.done %s129, 64
        $region28: #{tpu_custom_call.1} parent=23 // pred_fallthru
          _
        %s138 = sand.u32 %s40, 1
        %s139 = scalar_lea.sflag [#allocation3], %s138
        %s140 = sand.u32 %s40, 1
        %s141 = smul.addr %s140, 4
        %s142 = scalar_lea.vmem [#allocation2], %s141
        %p143 = pneg %p53
        %p144 = pneg %p50
        %p145 = pneg %p81
        %p146 = pneg %p78
        %s147 = sand.u32 %s68, 1
        %s148 = scalar_lea.sflag [#allocation4], %s147
        %s149 = sand.u32 %s68, 1
        %s150 = smul.addr %s149, 4
        %s151 = scalar_lea.vmem [#allocation5], %s150
        %v152 = vld [vmem:[%s132] sm:$0xf]
        %v153 = vmul.f32 %v152, %v152
        %vm154 = vcmask 1043456
        %v155 = vsel %vm154, %v153, 0.0
        %v156 = vrot.slane %v155, 4
        %v157 = vadd.f32 %v155, %v156
        %v158 = vrot.slane %v157, 2
        %v159 = vadd.f32 %v157, %v158
        %v160 = vrot.slane %v159, 1
        %v161 = vadd.f32 %v159, %v160
        %v162 = vmax.f32 %v161, 1e-24
        %v163 = vrsqrt.pop %v162
        %v164 = vmul.f32 %v163, %v162
        %v165 = vmul.f32 %v164, %v163
        %v166 = vmul.f32 0.5, %v165
        %v167 = vsub.f32 1.5, %v166
        %v168 = vmul.f32 %v163, %v167
        %vm169 = vweird.f32 %v162
        %vm170 = vweird.f32 %v163
        %vm171 = vmor %vm169, %vm170
        %v172 = vsel %vm171, %v163, %v168
        %v173 = vmul.f32 %v152, %v172
        %174 = vst [vmem:[%s151] sm:$0xf] %v173
        %s175 = sand.u32 %s68, 1
        %s176 = scalar_lea.sflag [#allocation4], %s175
        %s177 = sand.u32 %s68, 1
        %s178 = smul.addr %s177, 4
        %s179 = scalar_lea.vmem [#allocation5], %s178
        // Predicated region
        $region29: #{tpu_custom_call.1} parent=23 // pred_check
          %p180 = pneg %p78
        $region30: #{tpu_custom_call.1} parent=23 // pred_check_branch
          %182 = sbr.rel (%p180) target = $region32
        $region31: #{tpu_custom_call.1} parent=23 // pred_region
          %184 = vsyncadd %s176, 0
          %s185 = smul.addr %s22, 2
          %s186 = sadd.s32 %s23, %s185
          %s187 = smul.addr %s186, 4
          %s188 = scalar_lea.hbm %s1, %s187
          %s190 = sshll.u32 %s179, 4
          %s191 = int_to_ptr.vmem [resolvable:$true] %s190
          %s192 = sshll.u32 %s188, 4
          %s193 = int_to_ptr.hbm [resolvable:$true] %s192
          %195 = dma.vmem_to_hbm [thread:$0]  %s191, 64, %s193, %s176
        $region32: #{tpu_custom_call.1} parent=23 // pred_fallthru
          _
      $region24: #{tpu_custom_call.1} parent=5 // pred_fallthru
        _
      %p196 = scmp.le.s32.totalorder 2, %s13
      // Predicated region
      $region33: #{tpu_custom_call.1} parent=5 // pred_check
        %p197 = pneg %p196
      $region34: #{tpu_custom_call.1} parent=5 // pred_check_branch
        %199 = sbr.rel (%p197) target = $region36
      $region35: #{tpu_custom_call.1} parent=5 // pred_region
        %s200 = ssub.s32 %s13, 2
        // Predicated region
        $region37: #{tpu_custom_call.1} parent=35 // pred_check
          %p201 = pneg %p84
        $region38: #{tpu_custom_call.1} parent=35 // pred_check_branch
          %203 = sbr.rel (%p201) target = $region40
        $region39: #{tpu_custom_call.1} parent=35 // pred_region
          %s204 = sand.u32 %s69, 1
          %s205 = scalar_lea.sflag [#allocation4], %s204
          %s206 = sand.u32 %s69, 1
          %s207 = smul.addr %s206, 4
          %s208 = scalar_lea.vmem [#allocation5], %s207
          %210 = dma.done %s205, 64
        $region40: #{tpu_custom_call.1} parent=35 // pred_fallthru
          _
      $region36: #{tpu_custom_call.1} parent=5 // pred_fallthru
        _
    $region6: #{tpu_custom_call.1} parent=1 // loop_footer
      %s17 = sadd.s32 1, %s13
    $region7: #{tpu_custom_call.1} parent=1 // loop_footer_branch
      %12 = sbr.rel target = $region3
    $region8: #{tpu_custom_call.1} parent=1 // loop_exit
      _
    %211 = vsyncpa [#allocation3], 1
    %s212 = scalar_lea.sflag [#allocation3], 1
    %213 = vsyncpa %s212, 1
    %214 = vsyncpa [#allocation4], 1
    %s215 = scalar_lea.sflag [#allocation4], 1
    %216 = vsyncpa %s215, 1

</llo_original>
